<compile_context>
chip_gen: v5e
topology: v5e:2x2
jax: 0.10.0
libtpu: 0.0.40
codegen_flags: <defaults>
</compile_context>

<pallas_src>
import math

import jax
import jax.numpy as jnp
from jax.experimental import pallas as pl
from jax.experimental.pallas import tpu as pltpu

# ---- model hyper-parameters (small, consistent with the module) -------------
B = 2          # batch
S = 8          # sequence length
D_MODEL = 32   # d_model
NUM_HEADS = 4
D_K = D_MODEL // NUM_HEADS
D_FF = 64
DROPOUT = 0.1  # identity in eval mode
LN_EPS = 1e-5

# packed-parameter layout (columns): [Wqkv : 3D][Wo : D][W1 : F][W2^T : F]
P_COLS = 4 * D_MODEL + 2 * D_FF        # 256
_BIAS_ROW = D_MODEL                    # bias / LN rows start after the weight rows


def _layer_norm(h, gamma, beta):
    # LayerNorm over last dim, eps matches torch default 1e-5.
    mean = jnp.mean(h, axis=-1, keepdims=True)
    var = jnp.mean((h - mean) * (h - mean), axis=-1, keepdims=True)
    return (h - mean) * jax.lax.rsqrt(var + LN_EPS) * gamma + beta


def encoder_layer_kernel(x_ref, mask_ref, p_ref, out_ref):
    x = x_ref[...]                                          # (B*S, D)

    # ---- packed parameters: single VMEM block, static slices ----------------
    w_qkv = p_ref[0:D_MODEL, 0:3 * D_MODEL]                 # (D, 3D)
    w_o   = p_ref[0:D_MODEL, 3 * D_MODEL:4 * D_MODEL]       # (D, D)
    w_1   = p_ref[0:D_MODEL, 4 * D_MODEL:4 * D_MODEL + D_FF]              # (D, F)
    w_2t  = p_ref[0:D_MODEL, 4 * D_MODEL + D_FF:4 * D_MODEL + 2 * D_FF]   # (D, F) = W2^T

    r = _BIAS_ROW
    b_qkv = p_ref[r + 0:r + 1, 0:3 * D_MODEL]               # (1, 3D)
    b_o   = p_ref[r + 1:r + 2, 0:D_MODEL]
    b_1   = p_ref[r + 2:r + 3, 0:D_FF]
    b_2   = p_ref[r + 3:r + 4, 0:D_MODEL]
    g_1   = p_ref[r + 4:r + 5, 0:D_MODEL]
    be_1  = p_ref[r + 5:r + 6, 0:D_MODEL]
    g_2   = p_ref[r + 6:r + 7, 0:D_MODEL]
    be_2  = p_ref[r + 7:r + 8, 0:D_MODEL]

    # attend mask, computed once (hoisted out of the head loop)
    keep = mask_ref[...] != 0                               # (B, 1, S) broadcasts over queries

    # ---- fused Q|K|V projection (single MXU push) ----------------------------
    qkv = jnp.dot(x, w_qkv, preferred_element_type=jnp.float32) + b_qkv
    q = qkv[:, 0 * D_MODEL:1 * D_MODEL]
    k = qkv[:, 1 * D_MODEL:2 * D_MODEL]
    v = qkv[:, 2 * D_MODEL:3 * D_MODEL]

    scale = 1.0 / math.sqrt(D_K)
    attn = jnp.zeros((B * S, D_MODEL), jnp.float32)

    # static head loop; batch handled by one batched einsum per head with the
    # contraction on the last dims of both operands (no K^T materialized).
    for h in range(NUM_HEADS):
        lo, hi = h * D_K, (h + 1) * D_K
        qh = q[:, lo:hi].reshape(B, S, D_K)
        kh = k[:, lo:hi].reshape(B, S, D_K)
        vh = v[:, lo:hi].reshape(B, S, D_K)

        sc = jnp.einsum('bqd,bkd->bqk', qh, kh,
                        preferred_element_type=jnp.float32) * scale     # (B,S,S)
        sc = jnp.where(keep, sc, -1e9)                                  # mask==0 -> drop
        sc = sc - jnp.max(sc, axis=-1, keepdims=True)
        p = jnp.exp(sc)
        p = p * pl.reciprocal(jnp.sum(p, axis=-1, keepdims=True), approx=True)

        ctx = jnp.einsum('bqk,bkd->bqd', p, vh,
                         preferred_element_type=jnp.float32)            # (B,S,Dk)
        # fold the output projection per head: ctx_h @ Wo[h*Dk:(h+1)*Dk, :]
        attn = attn + jnp.dot(ctx.reshape(B * S, D_K), w_o[lo:hi, :],
                              preferred_element_type=jnp.float32)
    attn = attn + b_o

    # ---- residual + LayerNorm1 (dropout = identity in eval) ------------------
    h1 = _layer_norm(x + attn, g_1, be_1)

    # ---- feed-forward: Linear -> ReLU -> Linear (W2 kept transposed) ---------
    f = jnp.dot(h1, w_1, preferred_element_type=jnp.float32) + b_1
    f = jnp.maximum(f, 0.0)
    f = jnp.einsum('nf,df->nd', f, w_2t,
                   preferred_element_type=jnp.float32) + b_2

    # ---- residual + LayerNorm2 ------------------------------------------------
    out_ref[...] = _layer_norm(h1 + f, g_2, be_2).astype(out_ref.dtype)


def encoder_layer(x, mask, params):
    """x: (B, S, D) f32, mask: (B, 1, S) int32 (nonzero = attend)."""
    (wq, bq, wk, bk, wv, bv, wo, bo, w1, b1, w2, b2, g1, be1, g2, be2) = params

    x_flat = x.reshape(B * S, D_MODEL)

    w_qkv = jnp.concatenate([wq, wk, wv], axis=1)             # (D, 3D)
    b_qkv = jnp.concatenate([bq, bk, bv], axis=1)             # (1, 3D)
    w_block = jnp.concatenate([w_qkv, wo, w1, w2.T], axis=1)  # (D, P_COLS)

    def row(v):
        v = v.reshape(1, -1)
        return jnp.pad(v, ((0, 0), (0, P_COLS - v.shape[1])))

    b_block = jnp.concatenate(
        [row(b_qkv), row(bo), row(b1), row(b2),
         row(g1), row(be1), row(g2), row(be2)], axis=0)       # (8, P_COLS)
    packed = jnp.concatenate([w_block, b_block], axis=0)      # (D+8, P_COLS)

    full = lambda shp: pl.BlockSpec(shp, lambda i, _s=shp: (0,) * len(_s))

    out_flat = pl.pallas_call(
        encoder_layer_kernel,
        out_shape=jax.ShapeDtypeStruct((B * S, D_MODEL), x.dtype),
        grid_spec=pltpu.PrefetchScalarGridSpec(
            num_scalar_prefetch=0,
            grid=(1,),                       # single step: whole layer at once
            in_specs=[
                full((B * S, D_MODEL)),      # x (flattened rows)
                full((B, 1, S)),             # mask
                full(packed.shape),          # ALL weights + biases + LN params
            ],
            out_specs=full((B * S, D_MODEL)),
        ),
        compiler_params=pltpu.CompilerParams(
            dimension_semantics=("arbitrary",)),
    )(x_flat, mask, packed)
    return out_flat.reshape(B, S, D_MODEL)


# ---- pure-JAX reference for validation ---------------------------------------
def encoder_layer_ref(x, mask, params):
    (wq, bq, wk, bk, wv, bv, wo, bo, w1, b1, w2, b2, g1, be1, g2, be2) = params
    q = x @ wq + bq
    k = x @ wk + bk
    v = x @ wv + bv
    qh = q.reshape(B, S, NUM_HEADS, D_K).transpose(0, 2, 1, 3)
    kh = k.reshape(B, S, NUM_HEADS, D_K).transpose(0, 2, 1, 3)
    vh = v.reshape(B, S, NUM_HEADS, D_K).transpose(0, 2, 1, 3)
    sc = jnp.einsum("bhqd,bhkd->bhqk", qh, kh) / math.sqrt(D_K)
    keep = (mask != 0)[:, None, :, :]             # (B,1,1,S)
    sc = jnp.where(keep, sc, -1e9)
    p = jax.nn.softmax(sc, axis=-1)
    o = jnp.einsum("bhqk,bhkd->bhqd", p, vh).transpose(0, 2, 1, 3).reshape(B, S, D_MODEL)
    attn = o @ wo + bo

    def ln(h, g, b):
        m = jnp.mean(h, -1, keepdims=True)
        va = jnp.mean((h - m) ** 2, -1, keepdims=True)
        return (h - m) / jnp.sqrt(va + LN_EPS) * g + b

    h1 = ln(x + attn, g1, be1)
    f = jnp.maximum(h1 @ w1 + b1, 0.0) @ w2 + b2
    return ln(h1 + f, g2, be2)


if __name__ == "__main__":
    key = jax.random.PRNGKey(0)
    ks = jax.random.split(key, 16)

    def w(k, shape, scale=0.1):
        return (scale * jax.random.normal(k, shape)).astype(jnp.float32)

    params = (
        w(ks[0], (D_MODEL, D_MODEL)), w(ks[1], (1, D_MODEL)),   # Wq, bq
        w(ks[2], (D_MODEL, D_MODEL)), w(ks[3], (1, D_MODEL)),   # Wk, bk
        w(ks[4], (D_MODEL, D_MODEL)), w(ks[5], (1, D_MODEL)),   # Wv, bv
        w(ks[6], (D_MODEL, D_MODEL)), w(ks[7], (1, D_MODEL)),   # Wo, bo
        w(ks[8], (D_MODEL, D_FF)),    w(ks[9], (1, D_FF)),      # FF W1, b1
        w(ks[10], (D_FF, D_MODEL)),   w(ks[11], (1, D_MODEL)),  # FF W2, b2
        jnp.ones((1, D_MODEL), jnp.float32), jnp.zeros((1, D_MODEL), jnp.float32),  # LN1
        jnp.ones((1, D_MODEL), jnp.float32), jnp.zeros((1, D_MODEL), jnp.float32),  # LN2
    )

    x = jax.random.normal(ks[12], (B, S, D_MODEL), dtype=jnp.float32)
    # attend mask (nonzero = keep), shape (B, 1, S); mask out tail of batch 1
    mask = jnp.ones((B, 1, S), dtype=jnp.int32)
    mask = mask.at[1, 0, 6:].set(0)

    out = jax.block_until_ready(encoder_layer(x, mask, params))
    ref = jax.block_until_ready(encoder_layer_ref(x, mask, params))

    assert out.shape == (B, S, D_MODEL)
    # tolerance slightly loosened for the EUP approximate reciprocal in softmax
    assert jnp.allclose(out, ref, atol=2e-3, rtol=2e-3), "mismatch vs JAX reference"
    print("KERNEL_OK")
</pallas_src>

<mosaic_0001>
module attributes {stable_mosaic.version = 11 : i64} {
  func.func @encoder_layer_kernel(%arg0: i32, %arg1: memref<16x32xf32, #tpu.memory_space<vmem>>, %arg2: memref<2x1x8xi32, #tpu.memory_space<vmem>>, %arg3: memref<40x256xf32, #tpu.memory_space<vmem>>, %arg4: memref<16x32xf32, #tpu.memory_space<vmem>>) attributes {dimension_semantics = [#tpu.dimension_semantics<arbitrary>], iteration_bounds = array<i64: 1>, scalar_prefetch = 0 : i64, scratch_operands = 0 : i64, tpu.core_type = #tpu.core_type<tc>, window_params = [{pipeline_mode = #tpu.pipeline_mode<synchronous>, transform_indices = @transform_0, window_bounds = array<i64: 16, 32>}, {pipeline_mode = #tpu.pipeline_mode<synchronous>, transform_indices = @transform_1, window_bounds = array<i64: 2, 1, 8>}, {pipeline_mode = #tpu.pipeline_mode<synchronous>, transform_indices = @transform_2, window_bounds = array<i64: 40, 256>}, {pipeline_mode = #tpu.pipeline_mode<synchronous>, transform_indices = @transform_3, window_bounds = array<i64: 16, 32>}]} {
    %c0 = arith.constant 0 : index
    %c0_0 = arith.constant 0 : index
    %0 = vector.load %arg1[%c0, %c0_0] : memref<16x32xf32, #tpu.memory_space<vmem>>, vector<16x32xf32>
    %c0_1 = arith.constant 0 : index
    %c0_2 = arith.constant 0 : index
    %1 = vector.load %arg3[%c0_1, %c0_2] : memref<40x256xf32, #tpu.memory_space<vmem>>, vector<32x96xf32>
    %c0_3 = arith.constant 0 : index
    %c96 = arith.constant 96 : index
    %2 = vector.load %arg3[%c0_3, %c96] : memref<40x256xf32, #tpu.memory_space<vmem>>, vector<32x32xf32>
    %c0_4 = arith.constant 0 : index
    %c128 = arith.constant 128 : index
    %3 = vector.load %arg3[%c0_4, %c128] : memref<40x256xf32, #tpu.memory_space<vmem>>, vector<32x64xf32>
    %c0_5 = arith.constant 0 : index
    %c192 = arith.constant 192 : index
    %4 = vector.load %arg3[%c0_5, %c192] : memref<40x256xf32, #tpu.memory_space<vmem>>, vector<32x64xf32>
    %c32 = arith.constant 32 : index
    %c0_6 = arith.constant 0 : index
    %5 = vector.load %arg3[%c32, %c0_6] : memref<40x256xf32, #tpu.memory_space<vmem>>, vector<1x96xf32>
    %c33 = arith.constant 33 : index
    %c0_7 = arith.constant 0 : index
    %6 = vector.load %arg3[%c33, %c0_7] : memref<40x256xf32, #tpu.memory_space<vmem>>, vector<1x32xf32>
    %c34 = arith.constant 34 : index
    %c0_8 = arith.constant 0 : index
    %7 = vector.load %arg3[%c34, %c0_8] : memref<40x256xf32, #tpu.memory_space<vmem>>, vector<1x64xf32>
    %c35 = arith.constant 35 : index
    %c0_9 = arith.constant 0 : index
    %8 = vector.load %arg3[%c35, %c0_9] : memref<40x256xf32, #tpu.memory_space<vmem>>, vector<1x32xf32>
    %c36 = arith.constant 36 : index
    %c0_10 = arith.constant 0 : index
    %9 = vector.load %arg3[%c36, %c0_10] : memref<40x256xf32, #tpu.memory_space<vmem>>, vector<1x32xf32>
    %c37 = arith.constant 37 : index
    %c0_11 = arith.constant 0 : index
    %10 = vector.load %arg3[%c37, %c0_11] : memref<40x256xf32, #tpu.memory_space<vmem>>, vector<1x32xf32>
    %c38 = arith.constant 38 : index
    %c0_12 = arith.constant 0 : index
    %11 = vector.load %arg3[%c38, %c0_12] : memref<40x256xf32, #tpu.memory_space<vmem>>, vector<1x32xf32>
    %c39 = arith.constant 39 : index
    %c0_13 = arith.constant 0 : index
    %12 = vector.load %arg3[%c39, %c0_13] : memref<40x256xf32, #tpu.memory_space<vmem>>, vector<1x32xf32>
    %c0_14 = arith.constant 0 : index
    %c0_15 = arith.constant 0 : index
    %c0_16 = arith.constant 0 : index
    %13 = vector.load %arg2[%c0_14, %c0_15, %c0_16] : memref<2x1x8xi32, #tpu.memory_space<vmem>>, vector<2x1x8xi32>
    %c0_i32 = arith.constant 0 : i32
    %14 = vector.broadcast %c0_i32 : i32 to vector<2x1x8xi32>
    %15 = arith.cmpi ne, %13, %14 : vector<2x1x8xi32>
    %cst = arith.constant dense<0.000000e+00> : vector<16x96xf32>
    %16 = tpu.matmul %0, %1, %cst {dimension_numbers = #tpu.dot_dimension_numbers<[1], [0], [0], [1], [0, 0, 1, 1], [], []>} : vector<16x32xf32>, vector<32x96xf32>, vector<16x96xf32> -> vector<16x96xf32>
    %17 = vector.broadcast %5 : vector<1x96xf32> to vector<16x96xf32>
    %18 = arith.addf %16, %17 : vector<16x96xf32>
    %19 = vector.extract_strided_slice %18 {offsets = [0, 0], sizes = [16, 32], strides = [1, 1]} : vector<16x96xf32> to vector<16x32xf32>
    %20 = vector.extract_strided_slice %18 {offsets = [0, 32], sizes = [16, 32], strides = [1, 1]} : vector<16x96xf32> to vector<16x32xf32>
    %21 = vector.extract_strided_slice %18 {offsets = [0, 64], sizes = [16, 32], strides = [1, 1]} : vector<16x96xf32> to vector<16x32xf32>
    %cst_17 = arith.constant 0.000000e+00 : f32
    %22 = vector.broadcast %cst_17 : f32 to vector<16x32xf32>
    %23 = vector.extract_strided_slice %19 {offsets = [0, 0], sizes = [16, 8], strides = [1, 1]} : vector<16x32xf32> to vector<16x8xf32>
    %24 = vector.shape_cast %23 : vector<16x8xf32> to vector<2x8x8xf32>
    %25 = vector.extract_strided_slice %20 {offsets = [0, 0], sizes = [16, 8], strides = [1, 1]} : vector<16x32xf32> to vector<16x8xf32>
    %26 = vector.shape_cast %25 : vector<16x8xf32> to vector<2x8x8xf32>
    %27 = vector.extract_strided_slice %21 {offsets = [0, 0], sizes = [16, 8], strides = [1, 1]} : vector<16x32xf32> to vector<16x8xf32>
    %28 = vector.shape_cast %27 : vector<16x8xf32> to vector<2x8x8xf32>
    "tpu.trace_start"() <{level = 10 : i32, message = "bqd,bkd->bqk"}> : () -> ()
    %cst_18 = arith.constant dense<0.000000e+00> : vector<2x8x8xf32>
    %29 = tpu.matmul %24, %26, %cst_18 {dimension_numbers = #tpu.dot_dimension_numbers<[2], [2], [1], [1], [0, 0, 0, 1, 1, 1], [0], [0]>} : vector<2x8x8xf32>, vector<2x8x8xf32>, vector<2x8x8xf32> -> vector<2x8x8xf32>
    "tpu.trace_stop"() : () -> ()
    %cst_19 = arith.constant 0.353553385 : f32
    %30 = vector.broadcast %cst_19 : f32 to vector<2x8x8xf32>
    %31 = arith.mulf %29, %30 : vector<2x8x8xf32>
    %cst_20 = arith.constant -1.000000e+09 : f32
    %32 = vector.shape_cast %15 : vector<2x1x8xi1> to vector<2x1x8xi1>
    %33 = vector.broadcast %32 : vector<2x1x8xi1> to vector<2x8x8xi1>
    %34 = vector.broadcast %cst_20 : f32 to vector<2x8x8xf32>
    %35 = arith.select %33, %31, %34 : vector<2x8x8xi1>, vector<2x8x8xf32>
    %cst_21 = arith.constant dense<0xFF800000> : vector<2x8xf32>
    %36 = vector.multi_reduction <maximumf>, %35, %cst_21 [2] : vector<2x8x8xf32> to vector<2x8xf32>
    %37 = vector.shape_cast %36 : vector<2x8xf32> to vector<2x8x1xf32>
    %38 = vector.broadcast %37 : vector<2x8x1xf32> to vector<2x8x8xf32>
    %39 = arith.subf %35, %38 : vector<2x8x8xf32>
    %40 = math.exp %39 : vector<2x8x8xf32>
    %cst_22 = arith.constant dense<0.000000e+00> : vector<2x8xf32>
    %41 = vector.multi_reduction <add>, %40, %cst_22 [2] : vector<2x8x8xf32> to vector<2x8xf32>
    %42 = vector.shape_cast %41 : vector<2x8xf32> to vector<2x8x1xf32>
    %43 = tpu.reciprocal %42 {approx = true} : vector<2x8x1xf32> -> vector<2x8x1xf32>
    %44 = vector.broadcast %43 : vector<2x8x1xf32> to vector<2x8x8xf32>
    %45 = arith.mulf %40, %44 : vector<2x8x8xf32>
    "tpu.trace_start"() <{level = 10 : i32, message = "bqk,bkd->bqd"}> : () -> ()
    %cst_23 = arith.constant dense<0.000000e+00> : vector<2x8x8xf32>
    %46 = tpu.matmul %45, %28, %cst_23 {dimension_numbers = #tpu.dot_dimension_numbers<[2], [1], [1], [2], [0, 0, 0, 1, 1, 2], [0], [0]>} : vector<2x8x8xf32>, vector<2x8x8xf32>, vector<2x8x8xf32> -> vector<2x8x8xf32>
    "tpu.trace_stop"() : () -> ()
    %47 = vector.shape_cast %46 : vector<2x8x8xf32> to vector<16x8xf32>
    %48 = vector.extract_strided_slice %2 {offsets = [0, 0], sizes = [8, 32], strides = [1, 1]} : vector<32x32xf32> to vector<8x32xf32>
    %cst_24 = arith.constant dense<0.000000e+00> : vector<16x32xf32>
    %49 = tpu.matmul %47, %48, %cst_24 {dimension_numbers = #tpu.dot_dimension_numbers<[1], [0], [0], [1], [0, 0, 1, 1], [], []>} : vector<16x8xf32>, vector<8x32xf32>, vector<16x32xf32> -> vector<16x32xf32>
    %50 = arith.addf %22, %49 : vector<16x32xf32>
    %51 = vector.extract_strided_slice %19 {offsets = [0, 8], sizes = [16, 8], strides = [1, 1]} : vector<16x32xf32> to vector<16x8xf32>
    %52 = vector.shape_cast %51 : vector<16x8xf32> to vector<2x8x8xf32>
    %53 = vector.extract_strided_slice %20 {offsets = [0, 8], sizes = [16, 8], strides = [1, 1]} : vector<16x32xf32> to vector<16x8xf32>
    %54 = vector.shape_cast %53 : vector<16x8xf32> to vector<2x8x8xf32>
    %55 = vector.extract_strided_slice %21 {offsets = [0, 8], sizes = [16, 8], strides = [1, 1]} : vector<16x32xf32> to vector<16x8xf32>
    %56 = vector.shape_cast %55 : vector<16x8xf32> to vector<2x8x8xf32>
    "tpu.trace_start"() <{level = 10 : i32, message = "bqd,bkd->bqk"}> : () -> ()
    %cst_25 = arith.constant dense<0.000000e+00> : vector<2x8x8xf32>
    %57 = tpu.matmul %52, %54, %cst_25 {dimension_numbers = #tpu.dot_dimension_numbers<[2], [2], [1], [1], [0, 0, 0, 1, 1, 1], [0], [0]>} : vector<2x8x8xf32>, vector<2x8x8xf32>, vector<2x8x8xf32> -> vector<2x8x8xf32>
    "tpu.trace_stop"() : () -> ()
    %cst_26 = arith.constant 0.353553385 : f32
    %58 = vector.broadcast %cst_26 : f32 to vector<2x8x8xf32>
    %59 = arith.mulf %57, %58 : vector<2x8x8xf32>
    %cst_27 = arith.constant -1.000000e+09 : f32
    %60 = vector.shape_cast %15 : vector<2x1x8xi1> to vector<2x1x8xi1>
    %61 = vector.broadcast %60 : vector<2x1x8xi1> to vector<2x8x8xi1>
    %62 = vector.broadcast %cst_27 : f32 to vector<2x8x8xf32>
    %63 = arith.select %61, %59, %62 : vector<2x8x8xi1>, vector<2x8x8xf32>
    %cst_28 = arith.constant dense<0xFF800000> : vector<2x8xf32>
    %64 = vector.multi_reduction <maximumf>, %63, %cst_28 [2] : vector<2x8x8xf32> to vector<2x8xf32>
    %65 = vector.shape_cast %64 : vector<2x8xf32> to vector<2x8x1xf32>
    %66 = vector.broadcast %65 : vector<2x8x1xf32> to vector<2x8x8xf32>
    %67 = arith.subf %63, %66 : vector<2x8x8xf32>
    %68 = math.exp %67 : vector<2x8x8xf32>
    %cst_29 = arith.constant dense<0.000000e+00> : vector<2x8xf32>
    %69 = vector.multi_reduction <add>, %68, %cst_29 [2] : vector<2x8x8xf32> to vector<2x8xf32>
    %70 = vector.shape_cast %69 : vector<2x8xf32> to vector<2x8x1xf32>
    %71 = tpu.reciprocal %70 {approx = true} : vector<2x8x1xf32> -> vector<2x8x1xf32>
    %72 = vector.broadcast %71 : vector<2x8x1xf32> to vector<2x8x8xf32>
    %73 = arith.mulf %68, %72 : vector<2x8x8xf32>
    "tpu.trace_start"() <{level = 10 : i32, message = "bqk,bkd->bqd"}> : () -> ()
    %cst_30 = arith.constant dense<0.000000e+00> : vector<2x8x8xf32>
    %74 = tpu.matmul %73, %56, %cst_30 {dimension_numbers = #tpu.dot_dimension_numbers<[2], [1], [1], [2], [0, 0, 0, 1, 1, 2], [0], [0]>} : vector<2x8x8xf32>, vector<2x8x8xf32>, vector<2x8x8xf32> -> vector<2x8x8xf32>
    "tpu.trace_stop"() : () -> ()
    %75 = vector.shape_cast %74 : vector<2x8x8xf32> to vector<16x8xf32>
    %76 = vector.extract_strided_slice %2 {offsets = [8, 0], sizes = [8, 32], strides = [1, 1]} : vector<32x32xf32> to vector<8x32xf32>
    %cst_31 = arith.constant dense<0.000000e+00> : vector<16x32xf32>
    %77 = tpu.matmul %75, %76, %cst_31 {dimension_numbers = #tpu.dot_dimension_numbers<[1], [0], [0], [1], [0, 0, 1, 1], [], []>} : vector<16x8xf32>, vector<8x32xf32>, vector<16x32xf32> -> vector<16x32xf32>
    %78 = arith.addf %50, %77 : vector<16x32xf32>
    %79 = vector.extract_strided_slice %19 {offsets = [0, 16], sizes = [16, 8], strides = [1, 1]} : vector<16x32xf32> to vector<16x8xf32>
    %80 = vector.shape_cast %79 : vector<16x8xf32> to vector<2x8x8xf32>
    %81 = vector.extract_strided_slice %20 {offsets = [0, 16], sizes = [16, 8], strides = [1, 1]} : vector<16x32xf32> to vector<16x8xf32>
    %82 = vector.shape_cast %81 : vector<16x8xf32> to vector<2x8x8xf32>
    %83 = vector.extract_strided_slice %21 {offsets = [0, 16], sizes = [16, 8], strides = [1, 1]} : vector<16x32xf32> to vector<16x8xf32>
    %84 = vector.shape_cast %83 : vector<16x8xf32> to vector<2x8x8xf32>
    "tpu.trace_start"() <{level = 10 : i32, message = "bqd,bkd->bqk"}> : () -> ()
    %cst_32 = arith.constant dense<0.000000e+00> : vector<2x8x8xf32>
    %85 = tpu.matmul %80, %82, %cst_32 {dimension_numbers = #tpu.dot_dimension_numbers<[2], [2], [1], [1], [0, 0, 0, 1, 1, 1], [0], [0]>} : vector<2x8x8xf32>, vector<2x8x8xf32>, vector<2x8x8xf32> -> vector<2x8x8xf32>
    "tpu.trace_stop"() : () -> ()
    %cst_33 = arith.constant 0.353553385 : f32
    %86 = vector.broadcast %cst_33 : f32 to vector<2x8x8xf32>
    %87 = arith.mulf %85, %86 : vector<2x8x8xf32>
    %cst_34 = arith.constant -1.000000e+09 : f32
    %88 = vector.shape_cast %15 : vector<2x1x8xi1> to vector<2x1x8xi1>
    %89 = vector.broadcast %88 : vector<2x1x8xi1> to vector<2x8x8xi1>
    %90 = vector.broadcast %cst_34 : f32 to vector<2x8x8xf32>
    %91 = arith.select %89, %87, %90 : vector<2x8x8xi1>, vector<2x8x8xf32>
    %cst_35 = arith.constant dense<0xFF800000> : vector<2x8xf32>
    %92 = vector.multi_reduction <maximumf>, %91, %cst_35 [2] : vector<2x8x8xf32> to vector<2x8xf32>
    %93 = vector.shape_cast %92 : vector<2x8xf32> to vector<2x8x1xf32>
    %94 = vector.broadcast %93 : vector<2x8x1xf32> to vector<2x8x8xf32>
    %95 = arith.subf %91, %94 : vector<2x8x8xf32>
    %96 = math.exp %95 : vector<2x8x8xf32>
    %cst_36 = arith.constant dense<0.000000e+00> : vector<2x8xf32>
    %97 = vector.multi_reduction <add>, %96, %cst_36 [2] : vector<2x8x8xf32> to vector<2x8xf32>
    %98 = vector.shape_cast %97 : vector<2x8xf32> to vector<2x8x1xf32>
    %99 = tpu.reciprocal %98 {approx = true} : vector<2x8x1xf32> -> vector<2x8x1xf32>
    %100 = vector.broadcast %99 : vector<2x8x1xf32> to vector<2x8x8xf32>
    %101 = arith.mulf %96, %100 : vector<2x8x8xf32>
    "tpu.trace_start"() <{level = 10 : i32, message = "bqk,bkd->bqd"}> : () -> ()
    %cst_37 = arith.constant dense<0.000000e+00> : vector<2x8x8xf32>
    %102 = tpu.matmul %101, %84, %cst_37 {dimension_numbers = #tpu.dot_dimension_numbers<[2], [1], [1], [2], [0, 0, 0, 1, 1, 2], [0], [0]>} : vector<2x8x8xf32>, vector<2x8x8xf32>, vector<2x8x8xf32> -> vector<2x8x8xf32>
    "tpu.trace_stop"() : () -> ()
    %103 = vector.shape_cast %102 : vector<2x8x8xf32> to vector<16x8xf32>
    %104 = vector.extract_strided_slice %2 {offsets = [16, 0], sizes = [8, 32], strides = [1, 1]} : vector<32x32xf32> to vector<8x32xf32>
    %cst_38 = arith.constant dense<0.000000e+00> : vector<16x32xf32>
    %105 = tpu.matmul %103, %104, %cst_38 {dimension_numbers = #tpu.dot_dimension_numbers<[1], [0], [0], [1], [0, 0, 1, 1], [], []>} : vector<16x8xf32>, vector<8x32xf32>, vector<16x32xf32> -> vector<16x32xf32>
    %106 = arith.addf %78, %105 : vector<16x32xf32>
    %107 = vector.extract_strided_slice %19 {offsets = [0, 24], sizes = [16, 8], strides = [1, 1]} : vector<16x32xf32> to vector<16x8xf32>
    %108 = vector.shape_cast %107 : vector<16x8xf32> to vector<2x8x8xf32>
    %109 = vector.extract_strided_slice %20 {offsets = [0, 24], sizes = [16, 8], strides = [1, 1]} : vector<16x32xf32> to vector<16x8xf32>
    %110 = vector.shape_cast %109 : vector<16x8xf32> to vector<2x8x8xf32>
    %111 = vector.extract_strided_slice %21 {offsets = [0, 24], sizes = [16, 8], strides = [1, 1]} : vector<16x32xf32> to vector<16x8xf32>
    %112 = vector.shape_cast %111 : vector<16x8xf32> to vector<2x8x8xf32>
    "tpu.trace_start"() <{level = 10 : i32, message = "bqd,bkd->bqk"}> : () -> ()
    %cst_39 = arith.constant dense<0.000000e+00> : vector<2x8x8xf32>
    %113 = tpu.matmul %108, %110, %cst_39 {dimension_numbers = #tpu.dot_dimension_numbers<[2], [2], [1], [1], [0, 0, 0, 1, 1, 1], [0], [0]>} : vector<2x8x8xf32>, vector<2x8x8xf32>, vector<2x8x8xf32> -> vector<2x8x8xf32>
    "tpu.trace_stop"() : () -> ()
    %cst_40 = arith.constant 0.353553385 : f32
    %114 = vector.broadcast %cst_40 : f32 to vector<2x8x8xf32>
    %115 = arith.mulf %113, %114 : vector<2x8x8xf32>
    %cst_41 = arith.constant -1.000000e+09 : f32
    %116 = vector.shape_cast %15 : vector<2x1x8xi1> to vector<2x1x8xi1>
    %117 = vector.broadcast %116 : vector<2x1x8xi1> to vector<2x8x8xi1>
    %118 = vector.broadcast %cst_41 : f32 to vector<2x8x8xf32>
    %119 = arith.select %117, %115, %118 : vector<2x8x8xi1>, vector<2x8x8xf32>
    %cst_42 = arith.constant dense<0xFF800000> : vector<2x8xf32>
    %120 = vector.multi_reduction <maximumf>, %119, %cst_42 [2] : vector<2x8x8xf32> to vector<2x8xf32>
    %121 = vector.shape_cast %120 : vector<2x8xf32> to vector<2x8x1xf32>
    %122 = vector.broadcast %121 : vector<2x8x1xf32> to vector<2x8x8xf32>
    %123 = arith.subf %119, %122 : vector<2x8x8xf32>
    %124 = math.exp %123 : vector<2x8x8xf32>
    %cst_43 = arith.constant dense<0.000000e+00> : vector<2x8xf32>
    %125 = vector.multi_reduction <add>, %124, %cst_43 [2] : vector<2x8x8xf32> to vector<2x8xf32>
    %126 = vector.shape_cast %125 : vector<2x8xf32> to vector<2x8x1xf32>
    %127 = tpu.reciprocal %126 {approx = true} : vector<2x8x1xf32> -> vector<2x8x1xf32>
    %128 = vector.broadcast %127 : vector<2x8x1xf32> to vector<2x8x8xf32>
    %129 = arith.mulf %124, %128 : vector<2x8x8xf32>
    "tpu.trace_start"() <{level = 10 : i32, message = "bqk,bkd->bqd"}> : () -> ()
    %cst_44 = arith.constant dense<0.000000e+00> : vector<2x8x8xf32>
    %130 = tpu.matmul %129, %112, %cst_44 {dimension_numbers = #tpu.dot_dimension_numbers<[2], [1], [1], [2], [0, 0, 0, 1, 1, 2], [0], [0]>} : vector<2x8x8xf32>, vector<2x8x8xf32>, vector<2x8x8xf32> -> vector<2x8x8xf32>
    "tpu.trace_stop"() : () -> ()
    %131 = vector.shape_cast %130 : vector<2x8x8xf32> to vector<16x8xf32>
    %132 = vector.extract_strided_slice %2 {offsets = [24, 0], sizes = [8, 32], strides = [1, 1]} : vector<32x32xf32> to vector<8x32xf32>
    %cst_45 = arith.constant dense<0.000000e+00> : vector<16x32xf32>
    %133 = tpu.matmul %131, %132, %cst_45 {dimension_numbers = #tpu.dot_dimension_numbers<[1], [0], [0], [1], [0, 0, 1, 1], [], []>} : vector<16x8xf32>, vector<8x32xf32>, vector<16x32xf32> -> vector<16x32xf32>
    %134 = arith.addf %106, %133 : vector<16x32xf32>
    %135 = vector.broadcast %6 : vector<1x32xf32> to vector<16x32xf32>
    %136 = arith.addf %134, %135 : vector<16x32xf32>
    %137 = arith.addf %0, %136 : vector<16x32xf32>
    %cst_46 = arith.constant dense<0.000000e+00> : vector<16xf32>
    %138 = vector.multi_reduction <add>, %137, %cst_46 [1] : vector<16x32xf32> to vector<16xf32>
    %139 = vector.shape_cast %138 : vector<16xf32> to vector<16x1xf32>
    %cst_47 = arith.constant 3.200000e+01 : f32
    %140 = vector.broadcast %cst_47 : f32 to vector<16x1xf32>
    %141 = arith.divf %139, %140 : vector<16x1xf32>
    %142 = vector.broadcast %141 : vector<16x1xf32> to vector<16x32xf32>
    %143 = arith.subf %137, %142 : vector<16x32xf32>
    %144 = vector.broadcast %141 : vector<16x1xf32> to vector<16x32xf32>
    %145 = arith.subf %137, %144 : vector<16x32xf32>
    %146 = arith.mulf %143, %145 : vector<16x32xf32>
    %cst_48 = arith.constant dense<0.000000e+00> : vector<16xf32>
    %147 = vector.multi_reduction <add>, %146, %cst_48 [1] : vector<16x32xf32> to vector<16xf32>
    %148 = vector.shape_cast %147 : vector<16xf32> to vector<16x1xf32>
    %cst_49 = arith.constant 3.200000e+01 : f32
    %149 = vector.broadcast %cst_49 : f32 to vector<16x1xf32>
    %150 = arith.divf %148, %149 : vector<16x1xf32>
    %151 = vector.broadcast %141 : vector<16x1xf32> to vector<16x32xf32>
    %152 = arith.subf %137, %151 : vector<16x32xf32>
    %cst_50 = arith.constant 9.99999974E-6 : f32
    %153 = vector.broadcast %cst_50 : f32 to vector<16x1xf32>
    %154 = arith.addf %150, %153 : vector<16x1xf32>
    %155 = math.rsqrt %154 : vector<16x1xf32>
    %156 = vector.broadcast %155 : vector<16x1xf32> to vector<16x32xf32>
    %157 = arith.mulf %152, %156 : vector<16x32xf32>
    %158 = vector.broadcast %9 : vector<1x32xf32> to vector<16x32xf32>
    %159 = arith.mulf %157, %158 : vector<16x32xf32>
    %160 = vector.broadcast %10 : vector<1x32xf32> to vector<16x32xf32>
    %161 = arith.addf %159, %160 : vector<16x32xf32>
    %cst_51 = arith.constant dense<0.000000e+00> : vector<16x64xf32>
    %162 = tpu.matmul %161, %3, %cst_51 {dimension_numbers = #tpu.dot_dimension_numbers<[1], [0], [0], [1], [0, 0, 1, 1], [], []>} : vector<16x32xf32>, vector<32x64xf32>, vector<16x64xf32> -> vector<16x64xf32>
    %163 = vector.broadcast %7 : vector<1x64xf32> to vector<16x64xf32>
    %164 = arith.addf %162, %163 : vector<16x64xf32>
    %cst_52 = arith.constant 0.000000e+00 : f32
    %165 = vector.broadcast %cst_52 : f32 to vector<16x64xf32>
    %166 = arith.maximumf %164, %165 : vector<16x64xf32>
    "tpu.trace_start"() <{level = 10 : i32, message = "nf,df->nd"}> : () -> ()
    %cst_53 = arith.constant dense<0.000000e+00> : vector<16x32xf32>
    %167 = tpu.matmul %166, %4, %cst_53 {dimension_numbers = #tpu.dot_dimension_numbers<[1], [1], [0], [0], [0, 0, 1, 0], [], []>} : vector<16x64xf32>, vector<32x64xf32>, vector<16x32xf32> -> vector<16x32xf32>
    "tpu.trace_stop"() : () -> ()
    %168 = vector.broadcast %8 : vector<1x32xf32> to vector<16x32xf32>
    %169 = arith.addf %167, %168 : vector<16x32xf32>
    %170 = arith.addf %161, %169 : vector<16x32xf32>
    %cst_54 = arith.constant dense<0.000000e+00> : vector<16xf32>
    %171 = vector.multi_reduction <add>, %170, %cst_54 [1] : vector<16x32xf32> to vector<16xf32>
    %172 = vector.shape_cast %171 : vector<16xf32> to vector<16x1xf32>
    %cst_55 = arith.constant 3.200000e+01 : f32
    %173 = vector.broadcast %cst_55 : f32 to vector<16x1xf32>
    %174 = arith.divf %172, %173 : vector<16x1xf32>
    %175 = vector.broadcast %174 : vector<16x1xf32> to vector<16x32xf32>
    %176 = arith.subf %170, %175 : vector<16x32xf32>
    %177 = vector.broadcast %174 : vector<16x1xf32> to vector<16x32xf32>
    %178 = arith.subf %170, %177 : vector<16x32xf32>
    %179 = arith.mulf %176, %178 : vector<16x32xf32>
    %cst_56 = arith.constant dense<0.000000e+00> : vector<16xf32>
    %180 = vector.multi_reduction <add>, %179, %cst_56 [1] : vector<16x32xf32> to vector<16xf32>
    %181 = vector.shape_cast %180 : vector<16xf32> to vector<16x1xf32>
    %cst_57 = arith.constant 3.200000e+01 : f32
    %182 = vector.broadcast %cst_57 : f32 to vector<16x1xf32>
    %183 = arith.divf %181, %182 : vector<16x1xf32>
    %184 = vector.broadcast %174 : vector<16x1xf32> to vector<16x32xf32>
    %185 = arith.subf %170, %184 : vector<16x32xf32>
    %cst_58 = arith.constant 9.99999974E-6 : f32
    %186 = vector.broadcast %cst_58 : f32 to vector<16x1xf32>
    %187 = arith.addf %183, %186 : vector<16x1xf32>
    %188 = math.rsqrt %187 : vector<16x1xf32>
    %189 = vector.broadcast %188 : vector<16x1xf32> to vector<16x32xf32>
    %190 = arith.mulf %185, %189 : vector<16x32xf32>
    %191 = vector.broadcast %11 : vector<1x32xf32> to vector<16x32xf32>
    %192 = arith.mulf %190, %191 : vector<16x32xf32>
    %193 = vector.broadcast %12 : vector<1x32xf32> to vector<16x32xf32>
    %194 = arith.addf %192, %193 : vector<16x32xf32>
    %c0_59 = arith.constant 0 : index
    %c0_60 = arith.constant 0 : index
    %195 = vector.load %arg4[%c0_59, %c0_60] : memref<16x32xf32, #tpu.memory_space<vmem>>, vector<16x32xf32>
    tpu.vector_store %arg4[%c0_59, %c0_60], %194 {strides = array<i32>} : memref<16x32xf32, #tpu.memory_space<vmem>>, vector<16x32xf32>,
    return
  }
  func.func @transform_0(%arg0: i32) -> (i32, i32) {
    %c0_i32 = arith.constant 0 : i32
    %c0_i32_0 = arith.constant 0 : i32
    %c0_i32_1 = arith.constant 0 : i32
    return %c0_i32, %c0_i32_0 : i32, i32
  }
  func.func @transform_1(%arg0: i32) -> (i32, i32, i32) {
    %c0_i32 = arith.constant 0 : i32
    %c0_i32_0 = arith.constant 0 : i32
    %c0_i32_1 = arith.constant 0 : i32
    %c0_i32_2 = arith.constant 0 : i32
    return %c0_i32, %c0_i32_0, %c0_i32_1 : i32, i32, i32
  }
  func.func @transform_2(%arg0: i32) -> (i32, i32) {
    %c0_i32 = arith.constant 0 : i32
    %c0_i32_0 = arith.constant 0 : i32
    %c0_i32_1 = arith.constant 0 : i32
    return %c0_i32, %c0_i32_0 : i32, i32
  }
  func.func @transform_3(%arg0: i32) -> (i32, i32) {
    %c0_i32 = arith.constant 0 : i32
    %c0_i32_0 = arith.constant 0 : i32
    %c0_i32_1 = arith.constant 0 : i32
    return %c0_i32, %c0_i32_0 : i32, i32
  }
}

</mosaic_0001>

<llo_original>
// kernel: tpu_custom_call.1
$region0: #{tpu_custom_call.1}
  #allocation0 [shape = 'u32[]', space=smem, size = 0x4, offset = 0x4, fixed_abs, tag = 'smem constant byte address 0x4 - core index']
  #allocation1 [shape = 'u32[72,128]{1,0:T(1,128)}', space=vmem, size = 0x9000, scoped, tag = 'internal scratch']
  %s0 = inlined_call_operand.hbm [shape: f32[16,32], index: 0, kind: input, shape index: {}]
  %s1 = inlined_call_operand.hbm [shape: s32[2,1,8], index: 1, kind: input, shape index: {}]
  %s2 = inlined_call_operand.hbm [shape: f32[40,256], index: 2, kind: input, shape index: {}]
  %s3 = inlined_call_operand.hbm [shape: f32[16,32], index: 3, kind: output, shape index: {}]
  %s4 = sld [smem:[#allocation0]]
  $region34: #{tpu_custom_call.1} parent=0
    _
  %s6 = ssub.s32 1, %s4
  %s7 = scalar_select 0, %s6, %s4
  $region1: #{tpu_custom_call.1} parent=0
    #allocation2 [shape = 'u8[8192]{0}', space=vmem, size = 0x2000, scoped, tag = 'input window, operand 0, single buffered']
    #allocation3 [shape = 's32[1]{0}', space=sflag, size = 0x4, scoped, tag = 'scoped memory for tpu_custom_call.1']
    #allocation4 [shape = 's32[1]{0}', space=sflag, size = 0x4, scoped, tag = 'scoped memory for tpu_custom_call.1']
    #allocation5 [shape = 'u8[1024]{0}', space=vmem, size = 0x400, scoped, tag = 'input window, operand 1, single buffered']
    #allocation6 [shape = 's32[1]{0}', space=sflag, size = 0x4, scoped, tag = 'scoped memory for tpu_custom_call.1']
    #allocation7 [shape = 'u8[40960]{0}', space=vmem, size = 0xa000, scoped, tag = 'input window, operand 2, single buffered']
    #allocation8 [shape = 'u8[8192]{0}', space=vmem, size = 0x2000, scoped, tag = 'output window, operand 0, single buffered']
    %8 = vsyncpa [#allocation3], 0
    %9 = vsyncpa [#allocation6], 0
    %10 = vsyncpa [#allocation4], 0
    // Predicated region
    $region2: #{tpu_custom_call.1} parent=1 // pred_check
      _
    $region3: #{tpu_custom_call.1} parent=1 // pred_check_branch
      %12 = sbr.rel (0) target = $region5
    $region4: #{tpu_custom_call.1} parent=1 // pred_region
      %14 = vsyncadd [#allocation3], 0
      %s15 = sshll.u32 %s0, 4
      %s16 = int_to_ptr.hbm [resolvable:$true] %s15
      %s17 = sshll.u32 [#allocation2], 4
      %s18 = int_to_ptr.vmem [resolvable:$true] %s17
      %23 = dma.hbm_to_vmem [thread:$0]  %s16, 256, %s18, [#allocation3], 128, 128, 8
    $region5: #{tpu_custom_call.1} parent=1 // pred_fallthru
      _
    // Predicated region
    $region6: #{tpu_custom_call.1} parent=1 // pred_check
      _
    $region7: #{tpu_custom_call.1} parent=1 // pred_check_branch
      %25 = sbr.rel (0) target = $region9
    $region8: #{tpu_custom_call.1} parent=1 // pred_region
      %27 = vsyncadd [#allocation6], 0
      %s28 = sshll.u32 %s1, 4
      %s29 = int_to_ptr.hbm [resolvable:$true] %s28
      %s30 = sshll.u32 [#allocation5], 4
      %s31 = int_to_ptr.vmem [resolvable:$true] %s30
      %36 = dma.hbm_to_vmem [thread:$0]  %s29, 32, %s31, [#allocation6], 16, 16, 1
    $region9: #{tpu_custom_call.1} parent=1 // pred_fallthru
      _
    // Predicated region
    $region10: #{tpu_custom_call.1} parent=1 // pred_check
      _
    $region11: #{tpu_custom_call.1} parent=1 // pred_check_branch
      %38 = sbr.rel (0) target = $region13
    $region12: #{tpu_custom_call.1} parent=1 // pred_region
      %40 = vsyncadd [#allocation6], 0
      %s41 = sshll.u32 %s2, 4
      %s42 = int_to_ptr.hbm [resolvable:$true] %s41
      %s43 = sshll.u32 [#allocation7], 4
      %s44 = int_to_ptr.vmem [resolvable:$true] %s43
      %49 = dma.hbm_to_vmem [thread:$0]  %s42, 1280, %s44, [#allocation6], 256, 256, 16
    $region13: #{tpu_custom_call.1} parent=1 // pred_fallthru
      _
    // Predicated region
    $region14: #{tpu_custom_call.1} parent=1 // pred_check
      _
    $region15: #{tpu_custom_call.1} parent=1 // pred_check_branch
      %51 = sbr.rel (0) target = $region17
    $region16: #{tpu_custom_call.1} parent=1 // pred_region
      %53 = dma.done [#allocation3], 256
    $region17: #{tpu_custom_call.1} parent=1 // pred_fallthru
      _
    // Predicated region
    $region18: #{tpu_custom_call.1} parent=1 // pred_check
      _
    $region19: #{tpu_custom_call.1} parent=1 // pred_check_branch
      %55 = sbr.rel (0) target = $region21
    $region20: #{tpu_custom_call.1} parent=1 // pred_region
      %57 = dma.done [#allocation6], 32
    $region21: #{tpu_custom_call.1} parent=1 // pred_fallthru
      _
    // Predicated region
    $region22: #{tpu_custom_call.1} parent=1 // pred_check
      _
    $region23: #{tpu_custom_call.1} parent=1 // pred_check_branch
      %59 = sbr.rel (0) target = $region25
    $region24: #{tpu_custom_call.1} parent=1 // pred_region
      %61 = dma.done [#allocation6], 1280
    $region25: #{tpu_custom_call.1} parent=1 // pred_fallthru
      _
    %v62 = vld [vmem:[#allocation2] sm:$0xff]
    %v63 = vld [vmem:[#allocation2 + $0x8] sm:$0xff]
    %v64 = vld [vmem:[#allocation7] sm:$0xff]
    %v65 = vld [vmem:[#allocation7 + $0x10] sm:$0xff]
    %v66 = vld [vmem:[#allocation7 + $0x20] sm:$0xff]
    %v67 = vld [vmem:[#allocation7 + $0x30] sm:$0xff]
    %v68 = vld [vmem:[#allocation7 + $0x8] sm:$0xff]
    %v69 = vld [vmem:[#allocation7 + $0x18] sm:$0xff]
    %v70 = vld [vmem:[#allocation7 + $0x28] sm:$0xff]
    %v71 = vld [vmem:[#allocation7 + $0x38] sm:$0xff]
    %v72 = vld [vmem:[#allocation7 + $0x40] ss:$0 sm:$0xff]
    %v73 = vld [vmem:[#allocation7 + $0x41] ss:$0 sm:$0xff]
    %v74 = vld [vmem:[#allocation7 + $0x42] ss:$0 sm:$0xff]
    %v75 = vld [vmem:[#allocation7 + $0x43] ss:$0 sm:$0xff]
    %v76 = vld [vmem:[#allocation7 + $0x44] ss:$0 sm:$0xff]
    %v77 = vld [vmem:[#allocation7 + $0x45] ss:$0 sm:$0xff]
    %v78 = vld [vmem:[#allocation7 + $0x46] ss:$0 sm:$0xff]
    %v79 = vld [vmem:[#allocation7 + $0x47] ss:$0 sm:$0xff]
    %v80 = vld [vmem:[#allocation5] sm:$0x1]
    %v81 = vld [vmem:[#allocation5 + $0x1] sm:$0x1]
    %vm82 = vcmp.ne.s32.totalorder %v80, 0
    %vm83 = vcmp.ne.s32.totalorder %v81, 0
    %vm84 = vcmask 261120
    %v86 = vsel %vm84, %v62, 0
    %v89 = vsel %vm84, %v63, 0
    %91 = vmatpush.msra.mxu0 0.0
    %92 = vmatpush.msra.mxu0 0.0
    %93 = vmatpush.msra.mxu0 0.0
    %94 = vmatpush.msra.mxu0 0.0
    %95 = vmatpush.msra.mxu0 0.0
    %96 = vmatpush.msra.mxu0 0.0
    %97 = vmatpush.msra.mxu0 0.0
    %98 = vmatpush.msra.mxu0 0.0
    %99 = vmatpush.msra.mxu0 0.0
    %100 = vmatpush.msra.mxu0 0.0
    %101 = vmatpush.msra.mxu0 0.0
    %102 = vmatpush.msra.mxu0 0.0
    %103 = vmatpush.msra.mxu0 %v67
    %104 = vmatpush.msra.mxu0 %v66
    %105 = vmatpush.msra.mxu0 %v65
    %106 = vmatpush.msra.mxu0 %v64
    %107 = vmatmul.f32.gmra.mxu0 %v86
    %v108 = vpop.f32.mrf.mxu0
    %v109 = vadd.f32 %v72, %v108
    %110 = vmatmul.f32.gmra.mxu0 %v89
    %v111 = vpop.f32.mrf.mxu0
    %v112 = vadd.f32 %v72, %v111
    %113 = vdwg.mxu0
    %115 = vrot.lane.b32.xlu0 %v109, 96
    %v116 = vpop.permute.xlu0 %115
    %vm117 = vcmask 64512
    %v118 = vsel %vm117, %v109, 0
    %v120 = vsel %vm117, %v116, 0
    %122 = vmatpush.xpose.msra.mxu0 0.0
    %123 = vmatpush.xpose.msra.mxu0 0.0
    %124 = vmatpush.xpose.msra.mxu0 0.0
    %125 = vmatpush.xpose.msra.mxu0 0.0
    %126 = vmatpush.xpose.msra.mxu0 0.0
    %127 = vmatpush.xpose.msra.mxu0 0.0
    %128 = vmatpush.xpose.msra.mxu0 0.0
    %129 = vmatpush.xpose.msra.mxu0 0.0
    %130 = vmatpush.xpose.msra.mxu0 0.0
    %131 = vmatpush.xpose.msra.mxu0 0.0
    %132 = vmatpush.xpose.msra.mxu0 0.0
    %133 = vmatpush.xpose.msra.mxu0 0.0
    %134 = vmatpush.xpose.msra.mxu0 0.0
    %135 = vmatpush.xpose.msra.mxu0 0.0
    %136 = vmatpush.xpose.msra.mxu0 0.0
    %137 = vmatpush.xpose.msra.mxu0 %v120
    %138 = vmatmul.f32.gmra.mxu0 %v118
    %v139 = vpop.f32.mrf.mxu0
    %v140 = vadd.f32 0.0, %v139
    %141 = vdwg.mxu0
    %143 = vrot.lane.b32.xlu0 %v112, 96
    %v144 = vpop.permute.xlu0 %143
    %v145 = vsel %vm117, %v112, 0
    %v147 = vsel %vm117, %v144, 0
    %149 = vmatpush.xpose.msra.mxu0 0.0
    %150 = vmatpush.xpose.msra.mxu0 0.0
    %151 = vmatpush.xpose.msra.mxu0 0.0
    %152 = vmatpush.xpose.msra.mxu0 0.0
    %153 = vmatpush.xpose.msra.mxu0 0.0
    %154 = vmatpush.xpose.msra.mxu0 0.0
    %155 = vmatpush.xpose.msra.mxu0 0.0
    %156 = vmatpush.xpose.msra.mxu0 0.0
    %157 = vmatpush.xpose.msra.mxu0 0.0
    %158 = vmatpush.xpose.msra.mxu0 0.0
    %159 = vmatpush.xpose.msra.mxu0 0.0
    %160 = vmatpush.xpose.msra.mxu0 0.0
    %161 = vmatpush.xpose.msra.mxu0 0.0
    %162 = vmatpush.xpose.msra.mxu0 0.0
    %163 = vmatpush.xpose.msra.mxu0 0.0
    %164 = vmatpush.xpose.msra.mxu0 %v147
    %165 = vmatmul.f32.gmra.mxu0 %v145
    %v166 = vpop.f32.mrf.mxu0
    %v167 = vadd.f32 0.0, %v166
    %168 = vdwg.mxu0
    %v169 = vmul.f32 %v140, 0.35355338
    %v170 = vmul.f32 %v167, 0.35355338
    %v171 = vsel %vm82, 1, 0
    %v172 = vsel %vm83, 1, 0
    %v173 = vperm.slane %v171, 0
    %v174 = vperm.slane %v172, 0
    %vm175 = vcmp.eq.s32.totalorder %v173, 1
    %vm176 = vcmp.eq.s32.totalorder %v174, 1
    %v177 = vsel %vm175, %v169, -1e+09
    %v178 = vsel %vm176, %v170, -1e+09
    %v179 = vsel %vm117, %v177, -inf
    %180 = vmax.xlane.f32.xlu0 %v179
    %v181 = vpop.xlane.xlu0 %180
    %v182 = vsel %vm117, %v178, -inf
    %183 = vmax.xlane.f32.xlu0 %v182
    %v184 = vpop.xlane.xlu0 %183
    %v185 = vsub.f32 %v177, %v181
    %v186 = vsub.f32 %v178, %v184
    %v187 = vmul.f32 %v185, 1.442695
    %v188 = vpow.pop %v187
    %v189 = vmul.f32 %v186, 1.442695
    %v190 = vpow.pop %v189
    %v191 = vsel %vm117, %v188, 0.0
    %192 = vadd.xlane.f32.xlu0 %v191
    %v193 = vpop.xlane.xlu0 %192
    %v194 = vsel %vm117, %v190, 0.0
    %195 = vadd.xlane.f32.xlu0 %v194
    %v196 = vpop.xlane.xlu0 %195
    %v197 = vrcp.pop %v193
    %v198 = vrcp.pop %v196
    %v199 = vmul.f32 %v188, %v197
    %v200 = vmul.f32 %v190, %v198
    %201 = vrot.lane.b32.xlu0 %v109, 64
    %v202 = vpop.permute.xlu0 %201
    %v205 = vsel %vm117, %v199, 0
    %207 = vmatpush.msra.mxu0 0.0
    %208 = vmatpush.msra.mxu0 0.0
    %209 = vmatpush.msra.mxu0 0.0
    %210 = vmatpush.msra.mxu0 0.0
    %211 = vmatpush.msra.mxu0 0.0
    %212 = vmatpush.msra.mxu0 0.0
    %213 = vmatpush.msra.mxu0 0.0
    %214 = vmatpush.msra.mxu0 0.0
    %215 = vmatpush.msra.mxu0 0.0
    %216 = vmatpush.msra.mxu0 0.0
    %217 = vmatpush.msra.mxu0 0.0
    %218 = vmatpush.msra.mxu0 0.0
    %219 = vmatpush.msra.mxu0 0.0
    %220 = vmatpush.msra.mxu0 0.0
    %221 = vmatpush.msra.mxu0 0.0
    %222 = vmatpush.msra.mxu0 %v202
    %223 = vmatmul.f32.gmra.mxu0 %v205
    %v224 = vpop.f32.mrf.mxu0
    %v225 = vadd.f32 0.0, %v224
    %226 = vdwg.mxu0
    %227 = vrot.lane.b32.xlu0 %v112, 64
    %v228 = vpop.permute.xlu0 %227
    %v231 = vsel %vm117, %v200, 0
    %233 = vmatpush.msra.mxu0 0.0
    %234 = vmatpush.msra.mxu0 0.0
    %235 = vmatpush.msra.mxu0 0.0
    %236 = vmatpush.msra.mxu0 0.0
    %237 = vmatpush.msra.mxu0 0.0
    %238 = vmatpush.msra.mxu0 0.0
    %239 = vmatpush.msra.mxu0 0.0
    %240 = vmatpush.msra.mxu0 0.0
    %241 = vmatpush.msra.mxu0 0.0
    %242 = vmatpush.msra.mxu0 0.0
    %243 = vmatpush.msra.mxu0 0.0
    %244 = vmatpush.msra.mxu0 0.0
    %245 = vmatpush.msra.mxu0 0.0
    %246 = vmatpush.msra.mxu0 0.0
    %247 = vmatpush.msra.mxu0 0.0
    %248 = vmatpush.msra.mxu0 %v228
    %249 = vmatmul.f32.gmra.mxu0 %v231
    %v250 = vpop.f32.mrf.mxu0
    %v251 = vadd.f32 0.0, %v250
    %252 = vdwg.mxu0
    %253 = vrot.lane.b32.xlu0 %v109, 120
    %v254 = vpop.permute.xlu0 %253
    %255 = vrot.lane.b32.xlu0 %v109, 88
    %v256 = vpop.permute.xlu0 %255
    %v257 = vsel %vm117, %v254, 0
    %v259 = vsel %vm117, %v256, 0
    %261 = vmatpush.xpose.msra.mxu0 0.0
    %262 = vmatpush.xpose.msra.mxu0 0.0
    %263 = vmatpush.xpose.msra.mxu0 0.0
    %264 = vmatpush.xpose.msra.mxu0 0.0
    %265 = vmatpush.xpose.msra.mxu0 0.0
    %266 = vmatpush.xpose.msra.mxu0 0.0
    %267 = vmatpush.xpose.msra.mxu0 0.0
    %268 = vmatpush.xpose.msra.mxu0 0.0
    %269 = vmatpush.xpose.msra.mxu0 0.0
    %270 = vmatpush.xpose.msra.mxu0 0.0
    %271 = vmatpush.xpose.msra.mxu0 0.0
    %272 = vmatpush.xpose.msra.mxu0 0.0
    %273 = vmatpush.xpose.msra.mxu0 0.0
    %274 = vmatpush.xpose.msra.mxu0 0.0
    %275 = vmatpush.xpose.msra.mxu0 0.0
    %276 = vmatpush.xpose.msra.mxu0 %v259
    %277 = vmatmul.f32.gmra.mxu0 %v257
    %v278 = vpop.f32.mrf.mxu0
    %v279 = vadd.f32 0.0, %v278
    %280 = vdwg.mxu0
    %281 = vrot.lane.b32.xlu0 %v112, 120
    %v282 = vpop.permute.xlu0 %281
    %283 = vrot.lane.b32.xlu0 %v112, 88
    %v284 = vpop.permute.xlu0 %283
    %v285 = vsel %vm117, %v282, 0
    %v287 = vsel %vm117, %v284, 0
    %289 = vmatpush.xpose.msra.mxu0 0.0
    %290 = vmatpush.xpose.msra.mxu0 0.0
    %291 = vmatpush.xpose.msra.mxu0 0.0
    %292 = vmatpush.xpose.msra.mxu0 0.0
    %293 = vmatpush.xpose.msra.mxu0 0.0
    %294 = vmatpush.xpose.msra.mxu0 0.0
    %295 = vmatpush.xpose.msra.mxu0 0.0
    %296 = vmatpush.xpose.msra.mxu0 0.0
    %297 = vmatpush.xpose.msra.mxu0 0.0
    %298 = vmatpush.xpose.msra.mxu0 0.0
    %299 = vmatpush.xpose.msra.mxu0 0.0
    %300 = vmatpush.xpose.msra.mxu0 0.0
    %301 = vmatpush.xpose.msra.mxu0 0.0
    %302 = vmatpush.xpose.msra.mxu0 0.0
    %303 = vmatpush.xpose.msra.mxu0 0.0
    %304 = vmatpush.xpose.msra.mxu0 %v287
    %305 = vmatmul.f32.gmra.mxu0 %v285
    %v306 = vpop.f32.mrf.mxu0
    %v307 = vadd.f32 0.0, %v306
    %308 = vdwg.mxu0
    %v309 = vmul.f32 %v279, 0.35355338
    %v310 = vmul.f32 %v307, 0.35355338
    %v311 = vsel %vm175, %v309, -1e+09
    %v312 = vsel %vm176, %v310, -1e+09
    %v313 = vsel %vm117, %v311, -inf
    %314 = vmax.xlane.f32.xlu0 %v313
    %v315 = vpop.xlane.xlu0 %314
    %v316 = vsel %vm117, %v312, -inf
    %317 = vmax.xlane.f32.xlu0 %v316
    %v318 = vpop.xlane.xlu0 %317
    %v319 = vsub.f32 %v311, %v315
    %v320 = vsub.f32 %v312, %v318
    %v321 = vmul.f32 %v319, 1.442695
    %v322 = vpow.pop %v321
    %v323 = vmul.f32 %v320, 1.442695
    %v324 = vpow.pop %v323
    %v325 = vsel %vm117, %v322, 0.0
    %326 = vadd.xlane.f32.xlu0 %v325
    %v327 = vpop.xlane.xlu0 %326
    %v328 = vsel %vm117, %v324, 0.0
    %329 = vadd.xlane.f32.xlu0 %v328
    %v330 = vpop.xlane.xlu0 %329
    %v331 = vrcp.pop %v327
    %v332 = vrcp.pop %v330
    %v333 = vmul.f32 %v322, %v331
    %v334 = vmul.f32 %v324, %v332
    %335 = vrot.lane.b32.xlu0 %v109, 56
    %v336 = vpop.permute.xlu0 %335
    %v339 = vsel %vm117, %v333, 0
    %341 = vmatpush.msra.mxu0 0.0
    %342 = vmatpush.msra.mxu0 0.0
    %343 = vmatpush.msra.mxu0 0.0
    %344 = vmatpush.msra.mxu0 0.0
    %345 = vmatpush.msra.mxu0 0.0
    %346 = vmatpush.msra.mxu0 0.0
    %347 = vmatpush.msra.mxu0 0.0
    %348 = vmatpush.msra.mxu0 0.0
    %349 = vmatpush.msra.mxu0 0.0
    %350 = vmatpush.msra.mxu0 0.0
    %351 = vmatpush.msra.mxu0 0.0
    %352 = vmatpush.msra.mxu0 0.0
    %353 = vmatpush.msra.mxu0 0.0
    %354 = vmatpush.msra.mxu0 0.0
    %355 = vmatpush.msra.mxu0 0.0
    %356 = vmatpush.msra.mxu0 %v336
    %357 = vmatmul.f32.gmra.mxu0 %v339
    %v358 = vpop.f32.mrf.mxu0
    %v359 = vadd.f32 0.0, %v358
    %360 = vdwg.mxu0
    %361 = vrot.lane.b32.xlu0 %v112, 56
    %v362 = vpop.permute.xlu0 %361
    %v365 = vsel %vm117, %v334, 0
    %367 = vmatpush.msra.mxu0 0.0
    %368 = vmatpush.msra.mxu0 0.0
    %369 = vmatpush.msra.mxu0 0.0
    %370 = vmatpush.msra.mxu0 0.0
    %371 = vmatpush.msra.mxu0 0.0
    %372 = vmatpush.msra.mxu0 0.0
    %373 = vmatpush.msra.mxu0 0.0
    %374 = vmatpush.msra.mxu0 0.0
    %375 = vmatpush.msra.mxu0 0.0
    %376 = vmatpush.msra.mxu0 0.0
    %377 = vmatpush.msra.mxu0 0.0
    %378 = vmatpush.msra.mxu0 0.0
    %379 = vmatpush.msra.mxu0 0.0
    %380 = vmatpush.msra.mxu0 0.0
    %381 = vmatpush.msra.mxu0 0.0
    %382 = vmatpush.msra.mxu0 %v362
    %383 = vmatmul.f32.gmra.mxu0 %v365
    %v384 = vpop.f32.mrf.mxu0
    %v385 = vadd.f32 0.0, %v384
    %386 = vdwg.mxu0
    %388 = vrot.lane.b32.xlu0 %v65, 32
    %v389 = vpop.permute.xlu0 %388
    %v392 = vsel %vm117, %v359, 0
    %v395 = vsel %vm117, %v385, 0
    %397 = vmatpush.msra.mxu0 0.0
    %398 = vmatpush.msra.mxu0 0.0
    %399 = vmatpush.msra.mxu0 0.0
    %400 = vmatpush.msra.mxu0 0.0
    %401 = vmatpush.msra.mxu0 0.0
    %402 = vmatpush.msra.mxu0 0.0
    %403 = vmatpush.msra.mxu0 0.0
    %404 = vmatpush.msra.mxu0 0.0
    %405 = vmatpush.msra.mxu0 0.0
    %406 = vmatpush.msra.mxu0 0.0
    %407 = vmatpush.msra.mxu0 0.0
    %408 = vmatpush.msra.mxu0 0.0
    %409 = vmatpush.msra.mxu0 0.0
    %410 = vmatpush.msra.mxu0 0.0
    %411 = vmatpush.msra.mxu0 0.0
    %412 = vmatpush.msra.mxu0 %v389
    %413 = vmatmul.f32.gmra.mxu0 %v392
    %v414 = vpop.f32.mrf.mxu0
    %v415 = vadd.f32 0.0, %v414
    %416 = vmatmul.f32.gmra.mxu0 %v395
    %v417 = vpop.f32.mrf.mxu0
    %v418 = vadd.f32 0.0, %v417
    %419 = vdwg.mxu0
    %421 = vrot.lane.b32.xlu0 %v64, 32
    %v422 = vpop.permute.xlu0 %421
    %v425 = vsel %vm117, %v225, 0
    %v428 = vsel %vm117, %v251, 0
    %430 = vmatpush.msra.mxu0 0.0
    %431 = vmatpush.msra.mxu0 0.0
    %432 = vmatpush.msra.mxu0 0.0
    %433 = vmatpush.msra.mxu0 0.0
    %434 = vmatpush.msra.mxu0 0.0
    %435 = vmatpush.msra.mxu0 0.0
    %436 = vmatpush.msra.mxu0 0.0
    %437 = vmatpush.msra.mxu0 0.0
    %438 = vmatpush.msra.mxu0 0.0
    %439 = vmatpush.msra.mxu0 0.0
    %440 = vmatpush.msra.mxu0 0.0
    %441 = vmatpush.msra.mxu0 0.0
    %442 = vmatpush.msra.mxu0 0.0
    %443 = vmatpush.msra.mxu0 0.0
    %444 = vmatpush.msra.mxu0 0.0
    %445 = vmatpush.msra.mxu0 %v422
    %446 = vmatmul.f32.gmra.mxu0 %v425
    %v447 = vpop.f32.mrf.mxu0
    %v448 = vadd.f32 %v415, %v447
    %449 = vmatmul.f32.gmra.mxu0 %v428
    %v450 = vpop.f32.mrf.mxu0
    %v451 = vadd.f32 %v418, %v450
    %452 = vdwg.mxu0
    %453 = vrot.lane.b32.xlu0 %v109, 112
    %v454 = vpop.permute.xlu0 %453
    %455 = vrot.lane.b32.xlu0 %v109, 80
    %v456 = vpop.permute.xlu0 %455
    %v457 = vsel %vm117, %v454, 0
    %v459 = vsel %vm117, %v456, 0
    %461 = vmatpush.xpose.msra.mxu0 0.0
    %462 = vmatpush.xpose.msra.mxu0 0.0
    %463 = vmatpush.xpose.msra.mxu0 0.0
    %464 = vmatpush.xpose.msra.mxu0 0.0
    %465 = vmatpush.xpose.msra.mxu0 0.0
    %466 = vmatpush.xpose.msra.mxu0 0.0
    %467 = vmatpush.xpose.msra.mxu0 0.0
    %468 = vmatpush.xpose.msra.mxu0 0.0
    %469 = vmatpush.xpose.msra.mxu0 0.0
    %470 = vmatpush.xpose.msra.mxu0 0.0
    %471 = vmatpush.xpose.msra.mxu0 0.0
    %472 = vmatpush.xpose.msra.mxu0 0.0
    %473 = vmatpush.xpose.msra.mxu0 0.0
    %474 = vmatpush.xpose.msra.mxu0 0.0
    %475 = vmatpush.xpose.msra.mxu0 0.0
    %476 = vmatpush.xpose.msra.mxu0 %v459
    %477 = vmatmul.f32.gmra.mxu0 %v457
    %v478 = vpop.f32.mrf.mxu0
    %v479 = vadd.f32 0.0, %v478
    %480 = vdwg.mxu0
    %481 = vrot.lane.b32.xlu0 %v112, 112
    %v482 = vpop.permute.xlu0 %481
    %483 = vrot.lane.b32.xlu0 %v112, 80
    %v484 = vpop.permute.xlu0 %483
    %v485 = vsel %vm117, %v482, 0
    %v487 = vsel %vm117, %v484, 0
    %489 = vmatpush.xpose.msra.mxu0 0.0
    %490 = vmatpush.xpose.msra.mxu0 0.0
    %491 = vmatpush.xpose.msra.mxu0 0.0
    %492 = vmatpush.xpose.msra.mxu0 0.0
    %493 = vmatpush.xpose.msra.mxu0 0.0
    %494 = vmatpush.xpose.msra.mxu0 0.0
    %495 = vmatpush.xpose.msra.mxu0 0.0
    %496 = vmatpush.xpose.msra.mxu0 0.0
    %497 = vmatpush.xpose.msra.mxu0 0.0
    %498 = vmatpush.xpose.msra.mxu0 0.0
    %499 = vmatpush.xpose.msra.mxu0 0.0
    %500 = vmatpush.xpose.msra.mxu0 0.0
    %501 = vmatpush.xpose.msra.mxu0 0.0
    %502 = vmatpush.xpose.msra.mxu0 0.0
    %503 = vmatpush.xpose.msra.mxu0 0.0
    %504 = vmatpush.xpose.msra.mxu0 %v487
    %505 = vmatmul.f32.gmra.mxu0 %v485
    %v506 = vpop.f32.mrf.mxu0
    %v507 = vadd.f32 0.0, %v506
    %508 = vdwg.mxu0
    %v509 = vmul.f32 %v479, 0.35355338
    %v510 = vmul.f32 %v507, 0.35355338
    %v511 = vsel %vm175, %v509, -1e+09
    %v512 = vsel %vm176, %v510, -1e+09
    %v513 = vsel %vm117, %v511, -inf
    %514 = vmax.xlane.f32.xlu0 %v513
    %v515 = vpop.xlane.xlu0 %514
    %v516 = vsel %vm117, %v512, -inf
    %517 = vmax.xlane.f32.xlu0 %v516
    %v518 = vpop.xlane.xlu0 %517
    %v519 = vsub.f32 %v511, %v515
    %v520 = vsub.f32 %v512, %v518
    %v521 = vmul.f32 %v519, 1.442695
    %v522 = vpow.pop %v521
    %v523 = vmul.f32 %v520, 1.442695
    %v524 = vpow.pop %v523
    %v525 = vsel %vm117, %v522, 0.0
    %526 = vadd.xlane.f32.xlu0 %v525
    %v527 = vpop.xlane.xlu0 %526
    %v528 = vsel %vm117, %v524, 0.0
    %529 = vadd.xlane.f32.xlu0 %v528
    %v530 = vpop.xlane.xlu0 %529
    %v531 = vrcp.pop %v527
    %v532 = vrcp.pop %v530
    %v533 = vmul.f32 %v522, %v531
    %v534 = vmul.f32 %v524, %v532
    %535 = vrot.lane.b32.xlu0 %v109, 48
    %v536 = vpop.permute.xlu0 %535
    %v539 = vsel %vm117, %v533, 0
    %541 = vmatpush.msra.mxu0 0.0
    %542 = vmatpush.msra.mxu0 0.0
    %543 = vmatpush.msra.mxu0 0.0
    %544 = vmatpush.msra.mxu0 0.0
    %545 = vmatpush.msra.mxu0 0.0
    %546 = vmatpush.msra.mxu0 0.0
    %547 = vmatpush.msra.mxu0 0.0
    %548 = vmatpush.msra.mxu0 0.0
    %549 = vmatpush.msra.mxu0 0.0
    %550 = vmatpush.msra.mxu0 0.0
    %551 = vmatpush.msra.mxu0 0.0
    %552 = vmatpush.msra.mxu0 0.0
    %553 = vmatpush.msra.mxu0 0.0
    %554 = vmatpush.msra.mxu0 0.0
    %555 = vmatpush.msra.mxu0 0.0
    %556 = vmatpush.msra.mxu0 %v536
    %557 = vmatmul.f32.gmra.mxu0 %v539
    %v558 = vpop.f32.mrf.mxu0
    %v559 = vadd.f32 0.0, %v558
    %560 = vdwg.mxu0
    %561 = vrot.lane.b32.xlu0 %v112, 48
    %v562 = vpop.permute.xlu0 %561
    %v565 = vsel %vm117, %v534, 0
    %567 = vmatpush.msra.mxu0 0.0
    %568 = vmatpush.msra.mxu0 0.0
    %569 = vmatpush.msra.mxu0 0.0
    %570 = vmatpush.msra.mxu0 0.0
    %571 = vmatpush.msra.mxu0 0.0
    %572 = vmatpush.msra.mxu0 0.0
    %573 = vmatpush.msra.mxu0 0.0
    %574 = vmatpush.msra.mxu0 0.0
    %575 = vmatpush.msra.mxu0 0.0
    %576 = vmatpush.msra.mxu0 0.0
    %577 = vmatpush.msra.mxu0 0.0
    %578 = vmatpush.msra.mxu0 0.0
    %579 = vmatpush.msra.mxu0 0.0
    %580 = vmatpush.msra.mxu0 0.0
    %581 = vmatpush.msra.mxu0 0.0
    %582 = vmatpush.msra.mxu0 %v562
    %583 = vmatmul.f32.gmra.mxu0 %v565
    %v584 = vpop.f32.mrf.mxu0
    %v585 = vadd.f32 0.0, %v584
    %586 = vdwg.mxu0
    %588 = vrot.lane.b32.xlu0 %v66, 32
    %v589 = vpop.permute.xlu0 %588
    %v592 = vsel %vm117, %v559, 0
    %v595 = vsel %vm117, %v585, 0
    %597 = vmatpush.msra.mxu0 0.0
    %598 = vmatpush.msra.mxu0 0.0
    %599 = vmatpush.msra.mxu0 0.0
    %600 = vmatpush.msra.mxu0 0.0
    %601 = vmatpush.msra.mxu0 0.0
    %602 = vmatpush.msra.mxu0 0.0
    %603 = vmatpush.msra.mxu0 0.0
    %604 = vmatpush.msra.mxu0 0.0
    %605 = vmatpush.msra.mxu0 0.0
    %606 = vmatpush.msra.mxu0 0.0
    %607 = vmatpush.msra.mxu0 0.0
    %608 = vmatpush.msra.mxu0 0.0
    %609 = vmatpush.msra.mxu0 0.0
    %610 = vmatpush.msra.mxu0 0.0
    %611 = vmatpush.msra.mxu0 0.0
    %612 = vmatpush.msra.mxu0 %v589
    %613 = vmatmul.f32.gmra.mxu0 %v592
    %v614 = vpop.f32.mrf.mxu0
    %v615 = vadd.f32 0.0, %v614
    %616 = vmatmul.f32.gmra.mxu0 %v595
    %v617 = vpop.f32.mrf.mxu0
    %v618 = vadd.f32 0.0, %v617
    %619 = vdwg.mxu0
    %v620 = vadd.f32 %v448, %v615
    %v621 = vadd.f32 %v451, %v618
    %622 = vrot.lane.b32.xlu0 %v109, 104
    %v623 = vpop.permute.xlu0 %622
    %624 = vrot.lane.b32.xlu0 %v109, 72
    %v625 = vpop.permute.xlu0 %624
    %v626 = vsel %vm117, %v623, 0
    %v628 = vsel %vm117, %v625, 0
    %630 = vmatpush.xpose.msra.mxu0 0.0
    %631 = vmatpush.xpose.msra.mxu0 0.0
    %632 = vmatpush.xpose.msra.mxu0 0.0
    %633 = vmatpush.xpose.msra.mxu0 0.0
    %634 = vmatpush.xpose.msra.mxu0 0.0
    %635 = vmatpush.xpose.msra.mxu0 0.0
    %636 = vmatpush.xpose.msra.mxu0 0.0
    %637 = vmatpush.xpose.msra.mxu0 0.0
    %638 = vmatpush.xpose.msra.mxu0 0.0
    %639 = vmatpush.xpose.msra.mxu0 0.0
    %640 = vmatpush.xpose.msra.mxu0 0.0
    %641 = vmatpush.xpose.msra.mxu0 0.0
    %642 = vmatpush.xpose.msra.mxu0 0.0
    %643 = vmatpush.xpose.msra.mxu0 0.0
    %644 = vmatpush.xpose.msra.mxu0 0.0
    %645 = vmatpush.xpose.msra.mxu0 %v628
    %646 = vmatmul.f32.gmra.mxu0 %v626
    %v647 = vpop.f32.mrf.mxu0
    %v648 = vadd.f32 0.0, %v647
    %649 = vdwg.mxu0
    %650 = vrot.lane.b32.xlu0 %v112, 104
    %v651 = vpop.permute.xlu0 %650
    %652 = vrot.lane.b32.xlu0 %v112, 72
    %v653 = vpop.permute.xlu0 %652
    %v654 = vsel %vm117, %v651, 0
    %v656 = vsel %vm117, %v653, 0
    %658 = vmatpush.xpose.msra.mxu0 0.0
    %659 = vmatpush.xpose.msra.mxu0 0.0
    %660 = vmatpush.xpose.msra.mxu0 0.0
    %661 = vmatpush.xpose.msra.mxu0 0.0
    %662 = vmatpush.xpose.msra.mxu0 0.0
    %663 = vmatpush.xpose.msra.mxu0 0.0
    %664 = vmatpush.xpose.msra.mxu0 0.0
    %665 = vmatpush.xpose.msra.mxu0 0.0
    %666 = vmatpush.xpose.msra.mxu0 0.0
    %667 = vmatpush.xpose.msra.mxu0 0.0
    %668 = vmatpush.xpose.msra.mxu0 0.0
    %669 = vmatpush.xpose.msra.mxu0 0.0
    %670 = vmatpush.xpose.msra.mxu0 0.0
    %671 = vmatpush.xpose.msra.mxu0 0.0
    %672 = vmatpush.xpose.msra.mxu0 0.0
    %673 = vmatpush.xpose.msra.mxu0 %v656
    %674 = vmatmul.f32.gmra.mxu0 %v654
    %v675 = vpop.f32.mrf.mxu0
    %v676 = vadd.f32 0.0, %v675
    %677 = vdwg.mxu0
    %v678 = vmul.f32 %v648, 0.35355338
    %v679 = vmul.f32 %v676, 0.35355338
    %v680 = vsel %vm175, %v678, -1e+09
    %v681 = vsel %vm176, %v679, -1e+09
    %v682 = vsel %vm117, %v680, -inf
    %683 = vmax.xlane.f32.xlu0 %v682
    %v684 = vpop.xlane.xlu0 %683
    %v685 = vsel %vm117, %v681, -inf
    %686 = vmax.xlane.f32.xlu0 %v685
    %v687 = vpop.xlane.xlu0 %686
    %v688 = vsub.f32 %v680, %v684
    %v689 = vsub.f32 %v681, %v687
    %v690 = vmul.f32 %v688, 1.442695
    %v691 = vpow.pop %v690
    %v692 = vmul.f32 %v689, 1.442695
    %v693 = vpow.pop %v692
    %v694 = vsel %vm117, %v691, 0.0
    %695 = vadd.xlane.f32.xlu0 %v694
    %v696 = vpop.xlane.xlu0 %695
    %v697 = vsel %vm117, %v693, 0.0
    %698 = vadd.xlane.f32.xlu0 %v697
    %v699 = vpop.xlane.xlu0 %698
    %v700 = vrcp.pop %v696
    %v701 = vrcp.pop %v699
    %v702 = vmul.f32 %v691, %v700
    %v703 = vmul.f32 %v693, %v701
    %704 = vrot.lane.b32.xlu0 %v109, 40
    %v705 = vpop.permute.xlu0 %704
    %v708 = vsel %vm117, %v702, 0
    %710 = vmatpush.msra.mxu0 0.0
    %711 = vmatpush.msra.mxu0 0.0
    %712 = vmatpush.msra.mxu0 0.0
    %713 = vmatpush.msra.mxu0 0.0
    %714 = vmatpush.msra.mxu0 0.0
    %715 = vmatpush.msra.mxu0 0.0
    %716 = vmatpush.msra.mxu0 0.0
    %717 = vmatpush.msra.mxu0 0.0
    %718 = vmatpush.msra.mxu0 0.0
    %719 = vmatpush.msra.mxu0 0.0
    %720 = vmatpush.msra.mxu0 0.0
    %721 = vmatpush.msra.mxu0 0.0
    %722 = vmatpush.msra.mxu0 0.0
    %723 = vmatpush.msra.mxu0 0.0
    %724 = vmatpush.msra.mxu0 0.0
    %725 = vmatpush.msra.mxu0 %v705
    %726 = vmatmul.f32.gmra.mxu0 %v708
    %v727 = vpop.f32.mrf.mxu0
    %v728 = vadd.f32 0.0, %v727
    %729 = vdwg.mxu0
    %730 = vrot.lane.b32.xlu0 %v112, 40
    %v731 = vpop.permute.xlu0 %730
    %v734 = vsel %vm117, %v703, 0
    %736 = vmatpush.msra.mxu0 0.0
    %737 = vmatpush.msra.mxu0 0.0
    %738 = vmatpush.msra.mxu0 0.0
    %739 = vmatpush.msra.mxu0 0.0
    %740 = vmatpush.msra.mxu0 0.0
    %741 = vmatpush.msra.mxu0 0.0
    %742 = vmatpush.msra.mxu0 0.0
    %743 = vmatpush.msra.mxu0 0.0
    %744 = vmatpush.msra.mxu0 0.0
    %745 = vmatpush.msra.mxu0 0.0
    %746 = vmatpush.msra.mxu0 0.0
    %747 = vmatpush.msra.mxu0 0.0
    %748 = vmatpush.msra.mxu0 0.0
    %749 = vmatpush.msra.mxu0 0.0
    %750 = vmatpush.msra.mxu0 0.0
    %751 = vmatpush.msra.mxu0 %v731
    %752 = vmatmul.f32.gmra.mxu0 %v734
    %v753 = vpop.f32.mrf.mxu0
    %v754 = vadd.f32 0.0, %v753
    %755 = vdwg.mxu0
    %757 = vrot.lane.b32.xlu0 %v67, 32
    %v758 = vpop.permute.xlu0 %757
    %v761 = vsel %vm117, %v728, 0
    %v764 = vsel %vm117, %v754, 0
    %766 = vmatpush.msra.mxu0 0.0
    %767 = vmatpush.msra.mxu0 0.0
    %768 = vmatpush.msra.mxu0 0.0
    %769 = vmatpush.msra.mxu0 0.0
    %770 = vmatpush.msra.mxu0 0.0
    %771 = vmatpush.msra.mxu0 0.0
    %772 = vmatpush.msra.mxu0 0.0
    %773 = vmatpush.msra.mxu0 0.0
    %774 = vmatpush.msra.mxu0 0.0
    %775 = vmatpush.msra.mxu0 0.0
    %776 = vmatpush.msra.mxu0 0.0
    %777 = vmatpush.msra.mxu0 0.0
    %778 = vmatpush.msra.mxu0 0.0
    %779 = vmatpush.msra.mxu0 0.0
    %780 = vmatpush.msra.mxu0 0.0
    %781 = vmatpush.msra.mxu0 %v758
    %782 = vmatmul.f32.gmra.mxu0 %v761
    %v783 = vpop.f32.mrf.mxu0
    %v784 = vadd.f32 0.0, %v783
    %785 = vmatmul.f32.gmra.mxu0 %v764
    %v786 = vpop.f32.mrf.mxu0
    %v787 = vadd.f32 0.0, %v786
    %788 = vdwg.mxu0
    %v789 = vadd.f32 %v620, %v784
    %v790 = vadd.f32 %v621, %v787
    %v791 = vadd.f32 %v789, %v73
    %v792 = vadd.f32 %v790, %v73
    %v793 = vadd.f32 %v62, %v791
    %v794 = vadd.f32 %v63, %v792
    %v795 = vsel %vm84, %v793, 0.0
    %796 = vadd.xlane.f32.xlu0 %v795
    %v797 = vpop.xlane.xlu0 %796
    %v798 = vsel %vm84, %v794, 0.0
    %799 = vadd.xlane.f32.xlu0 %v798
    %v800 = vpop.xlane.xlu0 %799
    %v801 = vrcp.pop 32.0
    %v802 = vmul.f32 32.0, %v801
    %v803 = vsub.f32 1.0, %v802
    %v804 = vmul.f32 %v801, %v803
    %v805 = vadd.f32 %v801, %v804
    %vm806 = vweird.f32 %v801
    %v807 = vsel %vm806, %v801, %v805
    %v808 = vmul.f32 %v797, %v807
    %v809 = vmul.f32 %v800, %v807
    %v810 = vsub.f32 %v793, %v808
    %v811 = vsub.f32 %v794, %v809
    %v812 = vmul.f32 %v810, %v810
    %v813 = vmul.f32 %v811, %v811
    %v814 = vsel %vm84, %v812, 0.0
    %815 = vadd.xlane.f32.xlu0 %v814
    %v816 = vpop.xlane.xlu0 %815
    %v817 = vsel %vm84, %v813, 0.0
    %818 = vadd.xlane.f32.xlu0 %v817
    %v819 = vpop.xlane.xlu0 %818
    %v820 = vmul.f32 %v816, %v807
    %v821 = vmul.f32 %v819, %v807
    %v822 = vadd.f32 %v820, 1e-05
    %v823 = vadd.f32 %v821, 1e-05
    %v824 = vrsqrt.pop %v822
    %v825 = vmul.f32 %v824, %v822
    %v826 = vmul.f32 %v825, %v824
    %v827 = vmul.f32 0.5, %v826
    %v828 = vsub.f32 1.5, %v827
    %v829 = vmul.f32 %v824, %v828
    %vm830 = vweird.f32 %v822
    %vm831 = vweird.f32 %v824
    %vm832 = vmor %vm830, %vm831
    %v833 = vsel %vm832, %v824, %v829
    %v834 = vrsqrt.pop %v823
    %v835 = vmul.f32 %v834, %v823
    %v836 = vmul.f32 %v835, %v834
    %v837 = vmul.f32 0.5, %v836
    %v838 = vsub.f32 1.5, %v837
    %v839 = vmul.f32 %v834, %v838
    %vm840 = vweird.f32 %v823
    %vm841 = vweird.f32 %v834
    %vm842 = vmor %vm840, %vm841
    %v843 = vsel %vm842, %v834, %v839
    %v844 = vmul.f32 %v810, %v833
    %v845 = vmul.f32 %v811, %v843
    %v846 = vmul.f32 %v844, %v76
    %v847 = vmul.f32 %v845, %v76
    %v848 = vadd.f32 %v846, %v77
    %v849 = vadd.f32 %v847, %v77
    %v851 = vsel %vm84, %v848, 0
    %v854 = vsel %vm84, %v849, 0
    %856 = vmatpush.msra.mxu0 0.0
    %857 = vmatpush.msra.mxu0 0.0
    %858 = vmatpush.msra.mxu0 0.0
    %859 = vmatpush.msra.mxu0 0.0
    %860 = vmatpush.msra.mxu0 0.0
    %861 = vmatpush.msra.mxu0 0.0
    %862 = vmatpush.msra.mxu0 0.0
    %863 = vmatpush.msra.mxu0 0.0
    %864 = vmatpush.msra.mxu0 0.0
    %865 = vmatpush.msra.mxu0 0.0
    %866 = vmatpush.msra.mxu0 0.0
    %867 = vmatpush.msra.mxu0 0.0
    %868 = vmatpush.msra.mxu0 %v71
    %869 = vmatpush.msra.mxu0 %v70
    %870 = vmatpush.msra.mxu0 %v69
    %871 = vmatpush.msra.mxu0 %v68
    %872 = vmatmul.f32.gmra.mxu0 %v851
    %v873 = vpop.f32.mrf.mxu0
    %v874 = vadd.f32 %v74, %v873
    %875 = vmatmul.f32.gmra.mxu0 %v854
    %v876 = vpop.f32.mrf.mxu0
    %v877 = vadd.f32 %v74, %v876
    %878 = vdwg.mxu0
    %v879 = vmax.f32 %v874, 0.0
    %v880 = vmax.f32 %v877, 0.0
    %885 = vrot.lane.b32.xlu0 %v68, 64
    %v886 = vpop.permute.xlu0 %885
    %887 = vrot.lane.b32.xlu0 %v69, 64
    %v888 = vpop.permute.xlu0 %887
    %889 = vrot.lane.b32.xlu0 %v70, 64
    %v890 = vpop.permute.xlu0 %889
    %891 = vrot.lane.b32.xlu0 %v71, 64
    %v892 = vpop.permute.xlu0 %891
    %vm893 = vcmask 523264
    %v895 = vsel %vm893, %v879, 0
    %v898 = vsel %vm893, %v880, 0
    %v900 = vsel %vm893, %v886, 0
    %v902 = vsel %vm893, %v888, 0
    %v904 = vsel %vm893, %v890, 0
    %v906 = vsel %vm893, %v892, 0
    %908 = vmatpush.xpose.msra.mxu0 0.0
    %909 = vmatpush.xpose.msra.mxu0 0.0
    %910 = vmatpush.xpose.msra.mxu0 0.0
    %911 = vmatpush.xpose.msra.mxu0 0.0
    %912 = vmatpush.xpose.msra.mxu0 0.0
    %913 = vmatpush.xpose.msra.mxu0 0.0
    %914 = vmatpush.xpose.msra.mxu0 0.0
    %915 = vmatpush.xpose.msra.mxu0 0.0
    %916 = vmatpush.xpose.msra.mxu0 0.0
    %917 = vmatpush.xpose.msra.mxu0 0.0
    %918 = vmatpush.xpose.msra.mxu0 0.0
    %919 = vmatpush.xpose.msra.mxu0 0.0
    %920 = vmatpush.xpose.msra.mxu0 %v906
    %921 = vmatpush.xpose.msra.mxu0 %v904
    %922 = vmatpush.xpose.msra.mxu0 %v902
    %923 = vmatpush.xpose.msra.mxu0 %v900
    %924 = vmatmul.f32.gmra.mxu0 %v895
    %v925 = vpop.f32.mrf.mxu0
    %v926 = vadd.f32 %v75, %v925
    %927 = vmatmul.f32.gmra.mxu0 %v898
    %v928 = vpop.f32.mrf.mxu0
    %v929 = vadd.f32 %v75, %v928
    %930 = vdwg.mxu0
    %v931 = vadd.f32 %v848, %v926
    %v932 = vadd.f32 %v849, %v929
    %v933 = vsel %vm84, %v931, 0.0
    %934 = vadd.xlane.f32.xlu0 %v933
    %v935 = vpop.xlane.xlu0 %934
    %v936 = vsel %vm84, %v932, 0.0
    %937 = vadd.xlane.f32.xlu0 %v936
    %v938 = vpop.xlane.xlu0 %937
    %v939 = vmul.f32 %v935, %v807
    %v940 = vmul.f32 %v938, %v807
    %v941 = vsub.f32 %v931, %v939
    %v942 = vsub.f32 %v932, %v940
    %v943 = vmul.f32 %v941, %v941
    %v944 = vmul.f32 %v942, %v942
    %v945 = vsel %vm84, %v943, 0.0
    %946 = vadd.xlane.f32.xlu0 %v945
    %v947 = vpop.xlane.xlu0 %946
    %v948 = vsel %vm84, %v944, 0.0
    %949 = vadd.xlane.f32.xlu0 %v948
    %v950 = vpop.xlane.xlu0 %949
    %v951 = vmul.f32 %v947, %v807
    %v952 = vmul.f32 %v950, %v807
    %v953 = vadd.f32 %v951, 1e-05
    %v954 = vadd.f32 %v952, 1e-05
    %v955 = vrsqrt.pop %v953
    %v956 = vmul.f32 %v955, %v953
    %v957 = vmul.f32 %v956, %v955
    %v958 = vmul.f32 0.5, %v957
    %v959 = vsub.f32 1.5, %v958
    %v960 = vmul.f32 %v955, %v959
    %vm961 = vweird.f32 %v953
    %vm962 = vweird.f32 %v955
    %vm963 = vmor %vm961, %vm962
    %v964 = vsel %vm963, %v955, %v960
    %v965 = vrsqrt.pop %v954
    %v966 = vmul.f32 %v965, %v954
    %v967 = vmul.f32 %v966, %v965
    %v968 = vmul.f32 0.5, %v967
    %v969 = vsub.f32 1.5, %v968
    %v970 = vmul.f32 %v965, %v969
    %vm971 = vweird.f32 %v954
    %vm972 = vweird.f32 %v965
    %vm973 = vmor %vm971, %vm972
    %v974 = vsel %vm973, %v965, %v970
    %v975 = vmul.f32 %v941, %v964
    %v976 = vmul.f32 %v942, %v974
    %v977 = vmul.f32 %v975, %v78
    %v978 = vmul.f32 %v976, %v78
    %v979 = vadd.f32 %v977, %v79
    %v980 = vadd.f32 %v978, %v79
    %981 = vst.msk [vmem:[#allocation8] sm:$0xff] %vm84, %v979
    %982 = vst.msk [vmem:[#allocation8 + $0x8] sm:$0xff] %vm84, %v980
    // Predicated region
    $region26: #{tpu_custom_call.1} parent=1 // pred_check
      _
    $region27: #{tpu_custom_call.1} parent=1 // pred_check_branch
      %984 = sbr.rel (0) target = $region29
    $region28: #{tpu_custom_call.1} parent=1 // pred_region
      %986 = vsyncadd [#allocation4], 0
      %s987 = sshll.u32 [#allocation8], 4
      %s988 = int_to_ptr.vmem [resolvable:$true] %s987
      %s989 = sshll.u32 %s3, 4
      %s990 = int_to_ptr.hbm [resolvable:$true] %s989
      %995 = dma.vmem_to_hbm [thread:$0]  %s988, 256, %s990, [#allocation4], 128, 128, 8
    $region29: #{tpu_custom_call.1} parent=1 // pred_fallthru
      _
    // Predicated region
    $region30: #{tpu_custom_call.1} parent=1 // pred_check
      _
    $region31: #{tpu_custom_call.1} parent=1 // pred_check_branch
      %997 = sbr.rel (0) target = $region33
    $region32: #{tpu_custom_call.1} parent=1 // pred_region
      %999 = dma.done [#allocation4], 256
    $region33: #{tpu_custom_call.1} parent=1 // pred_fallthru
      _
    %1000 = vsyncpa [#allocation3], 1
    %1001 = vsyncpa [#allocation6], 1
    %1002 = vsyncpa [#allocation4], 1

</llo_original>
